<compile_context>
chip_gen: v6e
topology: v6e:2x2x1
jax: 0.10.0
libtpu: 0.0.40
codegen_flags: <defaults>
</compile_context>

<pallas_src>
import functools

import jax
import jax.numpy as jnp
from jax.experimental import pallas as pl
from jax.experimental.pallas import tpu as pltpu

INPUT_DIM = 9
HIDDEN_DIMS = [16, 64, 256, 16]
OUTPUT_DIM = 9
NEG_SLOPE = 0.01  # nn.LeakyReLU() default negative_slope


def _leaky_relu(v):
    return jnp.where(v > 0, v, NEG_SLOPE * v)


def mlp_kernel(x_ref,
               w0_ref, b0_ref,
               w1_ref, b1_ref,
               w2_ref, b2_ref,
               w3_ref, b3_ref,
               w4_ref, b4_ref,
               out_ref):
    """Fused 5-layer MLP forward for one (features, batch_tile) slab.

    Batch-minor (lane-dense) layout: x_ref (9, tile), out_ref (9, tile);
    weights are (d_out, d_in) bf16, biases (d_out, 1) f32.  Every matmul hits
    the MXU with bf16 operands / f32 accumulation; bias add + LeakyReLU run in
    f32 on the VPU.
    """

    def layer(h_f32, w_ref, b_ref):
        # y^T = W @ h^T : (d_out, d_in) @ (d_in, tile) -> (d_out, tile) f32
        return jnp.dot(w_ref[...], h_f32.astype(jnp.bfloat16),
                       preferred_element_type=jnp.float32) + b_ref[...]

    h = x_ref[...]                                  # f32 (9,   tile)
    h = _leaky_relu(layer(h, w0_ref, b0_ref))       # f32 (16,  tile)
    h = _leaky_relu(layer(h, w1_ref, b1_ref))       # f32 (64,  tile)
    h = _leaky_relu(layer(h, w2_ref, b2_ref))       # f32 (256, tile)
    h = _leaky_relu(layer(h, w3_ref, b3_ref))       # f32 (16,  tile)
    out_ref[...] = layer(h, w4_ref, b4_ref)         # f32 (9,   tile), no final act


def init_params(key):
    """PyTorch-style Linear init, PyTorch-native layout: W (out, in), b (out,)."""
    dims = [INPUT_DIM] + HIDDEN_DIMS + [OUTPUT_DIM]
    params = []
    for d_in, d_out in zip(dims[:-1], dims[1:]):
        key, kw, kb = jax.random.split(key, 3)
        bound = 1.0 / jnp.sqrt(jnp.float32(d_in))
        w = jax.random.uniform(kw, (d_out, d_in), jnp.float32, -bound, bound)
        b = jax.random.uniform(kb, (d_out,), jnp.float32, -bound, bound)
        params.append((w, b))
    return params


def prepare_params(params):
    """One-time, outside-jit prep: bf16 (out,in) weights, f32 (out,1) biases."""
    prepared = []
    for w, b in params:
        prepared.append((jnp.asarray(w, jnp.bfloat16),
                         jnp.asarray(b, jnp.float32).reshape(-1, 1)))
    return tuple(prepared)


def _round_up(n, m):
    return ((n + m - 1) // m) * m


def _cdiv(a, b):
    return -(-a // b)


def _detect_num_cores():
    """Best-effort TensorCore count of the local device (v7x has 2, v5e/v6e 1)."""
    try:
        dev = jax.local_devices()[0]
        n = getattr(dev, "num_cores", None)
        if isinstance(n, int) and n > 0:
            return n
    except Exception:
        pass
    return 1


def _plan_batch_tiling(batch, block_b, num_cores):
    """Pick (padded_batch, tile): tile is a multiple of 256 dividing padded_batch.

    Batch sits on the lane axis, so tiles are kept multiples of 256 (fills both
    256-wide MXU result columns on v6e/v7x; 128 would suffice on v5e).  Large
    tiles amortize the ~0.35us/step grid overhead.  A single-tile batch is only
    split when there is more than one TensorCore (megacore sharding); otherwise
    the extra grid step is pure overhead.
    """
    lane_mult = 256
    block_b = max(lane_mult, _round_up(block_b, lane_mult))
    padded = _round_up(max(batch, 1), lane_mult)

    steps = _cdiv(padded, block_b)
    if num_cores > 1:
        if steps == 1 and padded >= 2 * lane_mult:
            steps = 2                                   # give both TCs work
        elif steps > 1:
            steps = _round_up(steps, num_cores)         # keep TCs load-balanced

    tile = _round_up(_cdiv(padded, steps), lane_mult)
    padded = tile * steps
    return padded, tile


@functools.partial(jax.jit, static_argnames=("block_b", "num_cores"))
def mlp_forward(x, kernel_params, block_b=4096, num_cores=1):
    """x: (batch, 9) f32.  kernel_params: output of prepare_params()."""
    batch = x.shape[0]
    padded, tile = _plan_batch_tiling(batch, block_b, num_cores)

    # Layout plumbing only: present a batch-minor (9, padded) slab to the kernel.
    x_t = x.T
    if padded != batch:
        x_t = jnp.pad(x_t, ((0, 0), (0, padded - batch)))
    grid = (padded // tile,)

    x_spec = pl.BlockSpec((INPUT_DIM, tile), lambda i: (0, i))
    out_spec = pl.BlockSpec((OUTPUT_DIM, tile), lambda i: (0, i))

    param_specs = []
    flat_params = []
    for w, b in kernel_params:
        param_specs.append(pl.BlockSpec(w.shape, lambda i: (0, 0)))   # resident weight
        param_specs.append(pl.BlockSpec(b.shape, lambda i: (0, 0)))   # resident bias
        flat_params.extend([w, b])

    out_t = pl.pallas_call(
        mlp_kernel,
        out_shape=jax.ShapeDtypeStruct((OUTPUT_DIM, padded), jnp.float32),
        grid_spec=pltpu.PrefetchScalarGridSpec(
            num_scalar_prefetch=0,
            grid=grid,
            in_specs=[x_spec] + param_specs,
            out_specs=out_spec,
        ),
        compiler_params=pltpu.CompilerParams(
            dimension_semantics=("parallel",),
            vmem_limit_bytes=32 * 1024 * 1024,
        ),
    )(x_t, *flat_params)

    # NOTE: padded batch columns carry bias/LeakyReLU garbage; sliced off here.
    return out_t[:, :batch].T


def mlp_reference_f32(x, params):
    """Plain-JAX f32 reference (PyTorch semantics)."""
    h = x
    for w, b in params[:-1]:
        h = _leaky_relu(h @ w.T + b)
    w, b = params[-1]
    return h @ w.T + b


def mlp_reference_bf16(x, params):
    """Precision-matched reference (bf16 MXU operands, f32 accumulation/elementwise)."""
    def layer(h, w, b):
        return jnp.dot(h.astype(jnp.bfloat16), w.astype(jnp.bfloat16).T,
                       preferred_element_type=jnp.float32) + b
    h = x
    for w, b in params[:-1]:
        h = _leaky_relu(layer(h, w, b))
    w, b = params[-1]
    return layer(h, w, b)


if __name__ == "__main__":
    key = jax.random.PRNGKey(0)
    key, kx = jax.random.split(key)

    params = init_params(key)            # PyTorch-native f32 (out,in) / (out,)
    kparams = prepare_params(params)     # one-time bf16 / (out,1) prep, outside jit
    num_cores = _detect_num_cores()

    # Small batch (pads up to one 256-wide lane-dense tile).
    batch = 16
    x = jax.random.normal(kx, (batch, INPUT_DIM), jnp.float32)
    out = jax.block_until_ready(mlp_forward(x, kparams, num_cores=num_cores))
    assert out.shape == (batch, OUTPUT_DIM)
    assert jnp.allclose(out, mlp_reference_bf16(x, params), atol=2e-3, rtol=2e-3), \
        "mismatch vs bf16-matched reference"
    assert jnp.allclose(out, mlp_reference_f32(x, params), atol=5e-2, rtol=5e-2), \
        "mismatch vs f32 reference"

    # Odd batch (exercises the pad / slice path).
    batch2 = 13
    x2 = jax.random.normal(jax.random.PRNGKey(1), (batch2, INPUT_DIM), jnp.float32)
    out2 = jax.block_until_ready(mlp_forward(x2, kparams, num_cores=num_cores))
    assert out2.shape == (batch2, OUTPUT_DIM)
    assert jnp.allclose(out2, mlp_reference_bf16(x2, params), atol=2e-3, rtol=2e-3), \
        "mismatch vs bf16-matched reference (odd batch)"

    print("KERNEL_OK")
</pallas_src>

<mosaic_0001>
module attributes {stable_mosaic.version = 11 : i64} {
  func.func @mlp_kernel(%arg0: i32, %arg1: memref<9x256xf32, #tpu.memory_space<vmem>>, %arg2: memref<16x9xbf16, #tpu.memory_space<vmem>>, %arg3: memref<16x1xf32, #tpu.memory_space<vmem>>, %arg4: memref<64x16xbf16, #tpu.memory_space<vmem>>, %arg5: memref<64x1xf32, #tpu.memory_space<vmem>>, %arg6: memref<256x64xbf16, #tpu.memory_space<vmem>>, %arg7: memref<256x1xf32, #tpu.memory_space<vmem>>, %arg8: memref<16x256xbf16, #tpu.memory_space<vmem>>, %arg9: memref<16x1xf32, #tpu.memory_space<vmem>>, %arg10: memref<9x16xbf16, #tpu.memory_space<vmem>>, %arg11: memref<9x1xf32, #tpu.memory_space<vmem>>, %arg12: memref<9x256xf32, #tpu.memory_space<vmem>>) attributes {dimension_semantics = [#tpu.dimension_semantics<parallel>], iteration_bounds = array<i64: 1>, scalar_prefetch = 0 : i64, scratch_operands = 0 : i64, tpu.core_type = #tpu.core_type<tc>, window_params = [{transform_indices = @transform_0, window_bounds = array<i64: 9, 256>}, {pipeline_mode = #tpu.pipeline_mode<synchronous>, transform_indices = @transform_1, window_bounds = array<i64: 16, 9>}, {pipeline_mode = #tpu.pipeline_mode<synchronous>, transform_indices = @transform_2, window_bounds = array<i64: 16, 1>}, {pipeline_mode = #tpu.pipeline_mode<synchronous>, transform_indices = @transform_3, window_bounds = array<i64: 64, 16>}, {pipeline_mode = #tpu.pipeline_mode<synchronous>, transform_indices = @transform_4, window_bounds = array<i64: 64, 1>}, {pipeline_mode = #tpu.pipeline_mode<synchronous>, transform_indices = @transform_5, window_bounds = array<i64: 256, 64>}, {pipeline_mode = #tpu.pipeline_mode<synchronous>, transform_indices = @transform_6, window_bounds = array<i64: 256, 1>}, {pipeline_mode = #tpu.pipeline_mode<synchronous>, transform_indices = @transform_7, window_bounds = array<i64: 16, 256>}, {pipeline_mode = #tpu.pipeline_mode<synchronous>, transform_indices = @transform_8, window_bounds = array<i64: 16, 1>}, {pipeline_mode = #tpu.pipeline_mode<synchronous>, transform_indices = @transform_9, window_bounds = array<i64: 9, 16>}, {pipeline_mode = #tpu.pipeline_mode<synchronous>, transform_indices = @transform_10, window_bounds = array<i64: 9, 1>}, {transform_indices = @transform_11, window_bounds = array<i64: 9, 256>}]} {
    %c0 = arith.constant 0 : index
    %c0_0 = arith.constant 0 : index
    %0 = vector.load %arg1[%c0, %c0_0] : memref<9x256xf32, #tpu.memory_space<vmem>>, vector<9x256xf32>
    %c0_1 = arith.constant 0 : index
    %c0_2 = arith.constant 0 : index
    %1 = vector.load %arg2[%c0_1, %c0_2] : memref<16x9xbf16, #tpu.memory_space<vmem>>, vector<16x9xbf16>
    %2 = arith.truncf %0 : vector<9x256xf32> to vector<9x256xbf16>
    %cst = arith.constant dense<0.000000e+00> : vector<16x256xf32>
    %3 = tpu.matmul %1, %2, %cst {dimension_numbers = #tpu.dot_dimension_numbers<[1], [0], [0], [1], [0, 0, 1, 1], [], []>} : vector<16x9xbf16>, vector<9x256xbf16>, vector<16x256xf32> -> vector<16x256xf32>
    %c0_3 = arith.constant 0 : index
    %c0_4 = arith.constant 0 : index
    %4 = vector.load %arg3[%c0_3, %c0_4] : memref<16x1xf32, #tpu.memory_space<vmem>>, vector<16x1xf32>
    %5 = vector.broadcast %4 : vector<16x1xf32> to vector<16x256xf32>
    %6 = arith.addf %3, %5 : vector<16x256xf32>
    %cst_5 = arith.constant 0.000000e+00 : f32
    %7 = vector.broadcast %cst_5 : f32 to vector<16x256xf32>
    %8 = arith.cmpf ogt, %6, %7 : vector<16x256xf32>
    %cst_6 = arith.constant 0.00999999977 : f32
    %9 = vector.broadcast %cst_6 : f32 to vector<16x256xf32>
    %10 = arith.mulf %9, %6 : vector<16x256xf32>
    %11 = arith.select %8, %6, %10 : vector<16x256xi1>, vector<16x256xf32>
    %c0_7 = arith.constant 0 : index
    %c0_8 = arith.constant 0 : index
    %12 = vector.load %arg4[%c0_7, %c0_8] : memref<64x16xbf16, #tpu.memory_space<vmem>>, vector<64x16xbf16>
    %13 = arith.truncf %11 : vector<16x256xf32> to vector<16x256xbf16>
    %cst_9 = arith.constant dense<0.000000e+00> : vector<64x256xf32>
    %14 = tpu.matmul %12, %13, %cst_9 {dimension_numbers = #tpu.dot_dimension_numbers<[1], [0], [0], [1], [0, 0, 1, 1], [], []>} : vector<64x16xbf16>, vector<16x256xbf16>, vector<64x256xf32> -> vector<64x256xf32>
    %c0_10 = arith.constant 0 : index
    %c0_11 = arith.constant 0 : index
    %15 = vector.load %arg5[%c0_10, %c0_11] : memref<64x1xf32, #tpu.memory_space<vmem>>, vector<64x1xf32>
    %16 = vector.broadcast %15 : vector<64x1xf32> to vector<64x256xf32>
    %17 = arith.addf %14, %16 : vector<64x256xf32>
    %cst_12 = arith.constant 0.000000e+00 : f32
    %18 = vector.broadcast %cst_12 : f32 to vector<64x256xf32>
    %19 = arith.cmpf ogt, %17, %18 : vector<64x256xf32>
    %cst_13 = arith.constant 0.00999999977 : f32
    %20 = vector.broadcast %cst_13 : f32 to vector<64x256xf32>
    %21 = arith.mulf %20, %17 : vector<64x256xf32>
    %22 = arith.select %19, %17, %21 : vector<64x256xi1>, vector<64x256xf32>
    %c0_14 = arith.constant 0 : index
    %c0_15 = arith.constant 0 : index
    %23 = vector.load %arg6[%c0_14, %c0_15] : memref<256x64xbf16, #tpu.memory_space<vmem>>, vector<256x64xbf16>
    %24 = arith.truncf %22 : vector<64x256xf32> to vector<64x256xbf16>
    %cst_16 = arith.constant dense<0.000000e+00> : vector<256x256xf32>
    %25 = tpu.matmul %23, %24, %cst_16 {dimension_numbers = #tpu.dot_dimension_numbers<[1], [0], [0], [1], [0, 0, 1, 1], [], []>} : vector<256x64xbf16>, vector<64x256xbf16>, vector<256x256xf32> -> vector<256x256xf32>
    %c0_17 = arith.constant 0 : index
    %c0_18 = arith.constant 0 : index
    %26 = vector.load %arg7[%c0_17, %c0_18] : memref<256x1xf32, #tpu.memory_space<vmem>>, vector<256x1xf32>
    %27 = vector.broadcast %26 : vector<256x1xf32> to vector<256x256xf32>
    %28 = arith.addf %25, %27 : vector<256x256xf32>
    %cst_19 = arith.constant 0.000000e+00 : f32
    %29 = vector.broadcast %cst_19 : f32 to vector<256x256xf32>
    %30 = arith.cmpf ogt, %28, %29 : vector<256x256xf32>
    %cst_20 = arith.constant 0.00999999977 : f32
    %31 = vector.broadcast %cst_20 : f32 to vector<256x256xf32>
    %32 = arith.mulf %31, %28 : vector<256x256xf32>
    %33 = arith.select %30, %28, %32 : vector<256x256xi1>, vector<256x256xf32>
    %c0_21 = arith.constant 0 : index
    %c0_22 = arith.constant 0 : index
    %34 = vector.load %arg8[%c0_21, %c0_22] : memref<16x256xbf16, #tpu.memory_space<vmem>>, vector<16x256xbf16>
    %35 = arith.truncf %33 : vector<256x256xf32> to vector<256x256xbf16>
    %cst_23 = arith.constant dense<0.000000e+00> : vector<16x256xf32>
    %36 = tpu.matmul %34, %35, %cst_23 {dimension_numbers = #tpu.dot_dimension_numbers<[1], [0], [0], [1], [0, 0, 1, 1], [], []>} : vector<16x256xbf16>, vector<256x256xbf16>, vector<16x256xf32> -> vector<16x256xf32>
    %c0_24 = arith.constant 0 : index
    %c0_25 = arith.constant 0 : index
    %37 = vector.load %arg9[%c0_24, %c0_25] : memref<16x1xf32, #tpu.memory_space<vmem>>, vector<16x1xf32>
    %38 = vector.broadcast %37 : vector<16x1xf32> to vector<16x256xf32>
    %39 = arith.addf %36, %38 : vector<16x256xf32>
    %cst_26 = arith.constant 0.000000e+00 : f32
    %40 = vector.broadcast %cst_26 : f32 to vector<16x256xf32>
    %41 = arith.cmpf ogt, %39, %40 : vector<16x256xf32>
    %cst_27 = arith.constant 0.00999999977 : f32
    %42 = vector.broadcast %cst_27 : f32 to vector<16x256xf32>
    %43 = arith.mulf %42, %39 : vector<16x256xf32>
    %44 = arith.select %41, %39, %43 : vector<16x256xi1>, vector<16x256xf32>
    %c0_28 = arith.constant 0 : index
    %c0_29 = arith.constant 0 : index
    %45 = vector.load %arg10[%c0_28, %c0_29] : memref<9x16xbf16, #tpu.memory_space<vmem>>, vector<9x16xbf16>
    %46 = arith.truncf %44 : vector<16x256xf32> to vector<16x256xbf16>
    %cst_30 = arith.constant dense<0.000000e+00> : vector<9x256xf32>
    %47 = tpu.matmul %45, %46, %cst_30 {dimension_numbers = #tpu.dot_dimension_numbers<[1], [0], [0], [1], [0, 0, 1, 1], [], []>} : vector<9x16xbf16>, vector<16x256xbf16>, vector<9x256xf32> -> vector<9x256xf32>
    %c0_31 = arith.constant 0 : index
    %c0_32 = arith.constant 0 : index
    %48 = vector.load %arg11[%c0_31, %c0_32] : memref<9x1xf32, #tpu.memory_space<vmem>>, vector<9x1xf32>
    %49 = vector.broadcast %48 : vector<9x1xf32> to vector<9x256xf32>
    %50 = arith.addf %47, %49 : vector<9x256xf32>
    %c0_33 = arith.constant 0 : index
    %c0_34 = arith.constant 0 : index
    %51 = vector.load %arg12[%c0_33, %c0_34] : memref<9x256xf32, #tpu.memory_space<vmem>>, vector<9x256xf32>
    tpu.vector_store %arg12[%c0_33, %c0_34], %50 {strides = array<i32>} : memref<9x256xf32, #tpu.memory_space<vmem>>, vector<9x256xf32>,
    return
  }
  func.func @transform_0(%arg0: i32) -> (i32, i32) {
    %c0_i32 = arith.constant 0 : i32
    %c0_i32_0 = arith.constant 0 : i32
    return %c0_i32, %arg0 : i32, i32
  }
  func.func @transform_1(%arg0: i32) -> (i32, i32) {
    %c0_i32 = arith.constant 0 : i32
    %c0_i32_0 = arith.constant 0 : i32
    %c0_i32_1 = arith.constant 0 : i32
    return %c0_i32, %c0_i32_0 : i32, i32
  }
  func.func @transform_2(%arg0: i32) -> (i32, i32) {
    %c0_i32 = arith.constant 0 : i32
    %c0_i32_0 = arith.constant 0 : i32
    %c0_i32_1 = arith.constant 0 : i32
    return %c0_i32, %c0_i32_0 : i32, i32
  }
  func.func @transform_3(%arg0: i32) -> (i32, i32) {
    %c0_i32 = arith.constant 0 : i32
    %c0_i32_0 = arith.constant 0 : i32
    %c0_i32_1 = arith.constant 0 : i32
    return %c0_i32, %c0_i32_0 : i32, i32
  }
  func.func @transform_4(%arg0: i32) -> (i32, i32) {
    %c0_i32 = arith.constant 0 : i32
    %c0_i32_0 = arith.constant 0 : i32
    %c0_i32_1 = arith.constant 0 : i32
    return %c0_i32, %c0_i32_0 : i32, i32
  }
  func.func @transform_5(%arg0: i32) -> (i32, i32) {
    %c0_i32 = arith.constant 0 : i32
    %c0_i32_0 = arith.constant 0 : i32
    %c0_i32_1 = arith.constant 0 : i32
    return %c0_i32, %c0_i32_0 : i32, i32
  }
  func.func @transform_6(%arg0: i32) -> (i32, i32) {
    %c0_i32 = arith.constant 0 : i32
    %c0_i32_0 = arith.constant 0 : i32
    %c0_i32_1 = arith.constant 0 : i32
    return %c0_i32, %c0_i32_0 : i32, i32
  }
  func.func @transform_7(%arg0: i32) -> (i32, i32) {
    %c0_i32 = arith.constant 0 : i32
    %c0_i32_0 = arith.constant 0 : i32
    %c0_i32_1 = arith.constant 0 : i32
    return %c0_i32, %c0_i32_0 : i32, i32
  }
  func.func @transform_8(%arg0: i32) -> (i32, i32) {
    %c0_i32 = arith.constant 0 : i32
    %c0_i32_0 = arith.constant 0 : i32
    %c0_i32_1 = arith.constant 0 : i32
    return %c0_i32, %c0_i32_0 : i32, i32
  }
  func.func @transform_9(%arg0: i32) -> (i32, i32) {
    %c0_i32 = arith.constant 0 : i32
    %c0_i32_0 = arith.constant 0 : i32
    %c0_i32_1 = arith.constant 0 : i32
    return %c0_i32, %c0_i32_0 : i32, i32
  }
  func.func @transform_10(%arg0: i32) -> (i32, i32) {
    %c0_i32 = arith.constant 0 : i32
    %c0_i32_0 = arith.constant 0 : i32
    %c0_i32_1 = arith.constant 0 : i32
    return %c0_i32, %c0_i32_0 : i32, i32
  }
  func.func @transform_11(%arg0: i32) -> (i32, i32) {
    %c0_i32 = arith.constant 0 : i32
    %c0_i32_0 = arith.constant 0 : i32
    return %c0_i32, %arg0 : i32, i32
  }
}

</mosaic_0001>

<llo_original>
// kernel: mlp_forward.1
$region0: #{mlp_forward.1}
  #allocation0 [shape = 'u32[]', space=smem, size = 0x4, offset = 0x4, fixed_abs, tag = 'smem constant byte address 0x4 - core index']
  #allocation1 [shape = 'u32[144,128]{1,0:T(1,128)}', space=vmem, size = 0x12000, scoped, tag = 'internal scratch']
  %s0 = inlined_call_operand.vmem [shape: f32[9,256], index: 0, kind: input, shape index: {}]
  %s1 = inlined_call_operand.vmem [shape: bf16[16,9], index: 1, kind: input, shape index: {}]
  %s2 = inlined_call_operand.vmem [shape: f32[16,1], index: 2, kind: input, shape index: {}]
  %s3 = inlined_call_operand.vmem [shape: bf16[64,16], index: 3, kind: input, shape index: {}]
  %s4 = inlined_call_operand.vmem [shape: f32[64,1], index: 4, kind: input, shape index: {}]
  %s5 = inlined_call_operand.vmem [shape: bf16[256,64], index: 5, kind: input, shape index: {}]
  %s6 = inlined_call_operand.vmem [shape: f32[256,1], index: 6, kind: input, shape index: {}]
  %s7 = inlined_call_operand.vmem [shape: bf16[16,256], index: 7, kind: input, shape index: {}]
  %s8 = inlined_call_operand.vmem [shape: f32[16,1], index: 8, kind: input, shape index: {}]
  %s9 = inlined_call_operand.vmem [shape: bf16[9,16], index: 9, kind: input, shape index: {}]
  %s10 = inlined_call_operand.vmem [shape: f32[9,1], index: 10, kind: input, shape index: {}]
  %s11 = inlined_call_operand.vmem [shape: f32[9,256], index: 11, kind: output, shape index: {}]
  %s12 = sld [smem:[#allocation0]]
  $region54: #{mlp_forward.1} parent=0
    _
  %s14 = ssub.s32 1, %s12
  %s15 = scalar_select 0, %s14, %s12
  // Predicated region
  $region2: #{mlp_forward.1} parent=0 // pred_check
    _
  $region3: #{mlp_forward.1} parent=0 // pred_check_branch
    %17 = sbr.rel (0) target = $region5
  $region4: #{mlp_forward.1} parent=0 // pred_region
    _
  $region5: #{mlp_forward.1} parent=0 // pred_fallthru
    _
  // Predicated region
  $region6: #{mlp_forward.1} parent=0 // pred_check
    _
  $region7: #{mlp_forward.1} parent=0 // pred_check_branch
    %19 = sbr.rel (0) target = $region9
  $region8: #{mlp_forward.1} parent=0 // pred_region
    _
  $region9: #{mlp_forward.1} parent=0 // pred_fallthru
    _
  // Predicated region
  $region10: #{mlp_forward.1} parent=0 // pred_check
    _
  $region11: #{mlp_forward.1} parent=0 // pred_check_branch
    %21 = sbr.rel (0) target = $region13
  $region12: #{mlp_forward.1} parent=0 // pred_region
    _
  $region13: #{mlp_forward.1} parent=0 // pred_fallthru
    _
  // Predicated region
  $region14: #{mlp_forward.1} parent=0 // pred_check
    _
  $region15: #{mlp_forward.1} parent=0 // pred_check_branch
    %23 = sbr.rel (0) target = $region17
  $region16: #{mlp_forward.1} parent=0 // pred_region
    _
  $region17: #{mlp_forward.1} parent=0 // pred_fallthru
    _
  // Predicated region
  $region18: #{mlp_forward.1} parent=0 // pred_check
    _
  $region19: #{mlp_forward.1} parent=0 // pred_check_branch
    %25 = sbr.rel (0) target = $region21
  $region20: #{mlp_forward.1} parent=0 // pred_region
    _
  $region21: #{mlp_forward.1} parent=0 // pred_fallthru
    _
  // Predicated region
  $region22: #{mlp_forward.1} parent=0 // pred_check
    _
  $region23: #{mlp_forward.1} parent=0 // pred_check_branch
    %27 = sbr.rel (0) target = $region25
  $region24: #{mlp_forward.1} parent=0 // pred_region
    _
  $region25: #{mlp_forward.1} parent=0 // pred_fallthru
    _
  // Predicated region
  $region26: #{mlp_forward.1} parent=0 // pred_check
    _
  $region27: #{mlp_forward.1} parent=0 // pred_check_branch
    %29 = sbr.rel (0) target = $region29
  $region28: #{mlp_forward.1} parent=0 // pred_region
    _
  $region29: #{mlp_forward.1} parent=0 // pred_fallthru
    _
  // Predicated region
  $region30: #{mlp_forward.1} parent=0 // pred_check
    _
  $region31: #{mlp_forward.1} parent=0 // pred_check_branch
    %31 = sbr.rel (0) target = $region33
  $region32: #{mlp_forward.1} parent=0 // pred_region
    _
  $region33: #{mlp_forward.1} parent=0 // pred_fallthru
    _
  // Predicated region
  $region34: #{mlp_forward.1} parent=0 // pred_check
    _
  $region35: #{mlp_forward.1} parent=0 // pred_check_branch
    %33 = sbr.rel (0) target = $region37
  $region36: #{mlp_forward.1} parent=0 // pred_region
    _
  $region37: #{mlp_forward.1} parent=0 // pred_fallthru
    _
  // Predicated region
  $region38: #{mlp_forward.1} parent=0 // pred_check
    _
  $region39: #{mlp_forward.1} parent=0 // pred_check_branch
    %35 = sbr.rel (0) target = $region41
  $region40: #{mlp_forward.1} parent=0 // pred_region
    _
  $region41: #{mlp_forward.1} parent=0 // pred_fallthru
    _
  // Predicated region
  $region42: #{mlp_forward.1} parent=0 // pred_check
    _
  $region43: #{mlp_forward.1} parent=0 // pred_check_branch
    %37 = sbr.rel (0) target = $region45
  $region44: #{mlp_forward.1} parent=0 // pred_region
    _
  $region45: #{mlp_forward.1} parent=0 // pred_fallthru
    _
  %v39 = vld [vmem:[%s0] sm:$0xff]
  %v40 = vld [vmem:[%s0 + $0x8] sm:$0xff]
  %v41 = vld [vmem:[%s0 + $0x10] sm:$0x1]
  %v42 = vld [vmem:[%s0 + $0x18] sm:$0x1]
  %v43 = vld [vmem:[%s1] sm:$0xf]
  %v44 = vld [vmem:[%s1 + $0x4] sm:$0xf]
  %v45 = vpack.c.bf16 %v41, %v39
  %v46 = vpack.c.bf16 %v42, %v40
  %v47 = vld [vmem:[%s2] sm:$0xff]
  %v48 = vld [vmem:[%s2 + $0x8] sm:$0xff]
  %50 = vset.pattern.permute.xlu0 0
  %51 = vperm.xlu0 %50, %v47
  %v52 = vpop.permute.xlu0 %51
  %55 = vset.pattern.permute.xlu0 0
  %56 = vperm.xlu0 %55, %v48
  %v57 = vpop.permute.xlu0 %56
  %v61 = vunpack.c.l.b16 %v43
  %v62 = vunpack.c.l.b16 %v44
  %v63 = vpack.c.b16 %v62, %v61
  %vm64 = vcmask 72704
  %v66 = vsel %vm64, %v63, 0
  %vm68 = vcmask 1043456
  %vm69 = vcmask 1044480
  %v70 = vsel %vm68, 4294967295, 65535
  %v71 = vsel %vm69, %v70, 0
  %v73 = vand.u32 %v45, %v71
  %v76 = vand.u32 %v46, %v71
  %78 = vmatprep.subr.bf16.mxu0 0
  %79 = vmatpush1.bf16.msra.mxu0 0
  %80 = vmatprep.subr.bf16.mxu0 0
  %81 = vmatpush1.bf16.msra.mxu0 0
  %82 = vmatprep.subr.bf16.mxu0 0
  %83 = vmatpush1.bf16.msra.mxu0 0
  %84 = vmatprep.subr.bf16.mxu0 0
  %85 = vmatpush1.bf16.msra.mxu0 0
  %86 = vmatprep.subr.bf16.mxu0 0
  %87 = vmatpush1.bf16.msra.mxu0 0
  %88 = vmatprep.subr.bf16.mxu0 0
  %89 = vmatpush1.bf16.msra.mxu0 0
  %90 = vmatprep.subr.bf16.mxu0 0
  %91 = vmatpush1.bf16.msra.mxu0 0
  %92 = vmatprep.subr.bf16.mxu0 %v76
  %93 = vmatpush1.bf16.msra.mxu0 %v73
  %94 = vmatprep.subr.bf16.mxu0 0
  %95 = vmatpush2.bf16.msra.mxu0 0
  %96 = vmatprep.subr.bf16.mxu0 0
  %97 = vmatpush2.bf16.msra.mxu0 0
  %98 = vmatprep.subr.bf16.mxu0 0
  %99 = vmatpush2.bf16.msra.mxu0 0
  %100 = vmatprep.subr.bf16.mxu0 0
  %101 = vmatpush2.bf16.msra.mxu0 0
  %102 = vmatprep.subr.bf16.mxu0 0
  %103 = vmatpush2.bf16.msra.mxu0 0
  %104 = vmatprep.subr.bf16.mxu0 0
  %105 = vmatpush2.bf16.msra.mxu0 0
  %106 = vmatprep.subr.bf16.mxu0 0
  %107 = vmatpush2.bf16.msra.mxu0 0
  %108 = vmatprep.subr.bf16.mxu0 0
  %109 = vmatpush2.bf16.msra.mxu0 0
  %110 = vmatprep.mubr.bf16.mxu0 0
  %111 = vmatmul.mubr.bf16.gmra.mxu0 %v66
  %v112 = vpop.f32.mrf.mxu0
  %v113 = vadd.f32 %v52, %v112
  %v114 = vpop.f32.mrf.mxu0
  %v115 = vadd.f32 %v52, %v114
  %v116 = vpop.f32.mrf.mxu0
  %v117 = vadd.f32 %v57, %v116
  %v118 = vpop.f32.mrf.mxu0
  %v119 = vadd.f32 %v57, %v118
  %120 = vdwg.mxu0
  %vm121 = vcmp.gt.f32.partialorder %v113, 0.0
  %vm122 = vcmp.gt.f32.partialorder %v115, 0.0
  %vm123 = vcmp.gt.f32.partialorder %v117, 0.0
  %vm124 = vcmp.gt.f32.partialorder %v119, 0.0
  %v125 = vmul.f32 %v113, 0.01
  %v126 = vmul.f32 %v115, 0.01
  %v127 = vmul.f32 %v117, 0.01
  %v128 = vmul.f32 %v119, 0.01
  %v129 = vsel %vm121, %v113, %v125
  %v130 = vsel %vm122, %v115, %v126
  %v131 = vsel %vm123, %v117, %v127
  %v132 = vsel %vm124, %v119, %v128
  %v133 = vld [vmem:[%s3] sm:$0xf]
  %v134 = vld [vmem:[%s3 + $0x4] sm:$0xf]
  %v135 = vld [vmem:[%s3 + $0x8] sm:$0xf]
  %v136 = vld [vmem:[%s3 + $0xc] sm:$0xf]
  %v137 = vld [vmem:[%s3 + $0x10] sm:$0xf]
  %v138 = vld [vmem:[%s3 + $0x14] sm:$0xf]
  %v139 = vld [vmem:[%s3 + $0x18] sm:$0xf]
  %v140 = vld [vmem:[%s3 + $0x1c] sm:$0xf]
  %v141 = vpack.c.bf16 %v131, %v129
  %v142 = vpack.c.bf16 %v132, %v130
  %v143 = vld [vmem:[%s4] sm:$0xff]
  %v144 = vld [vmem:[%s4 + $0x8] sm:$0xff]
  %v145 = vld [vmem:[%s4 + $0x10] sm:$0xff]
  %v146 = vld [vmem:[%s4 + $0x18] sm:$0xff]
  %v147 = vld [vmem:[%s4 + $0x20] sm:$0xff]
  %v148 = vld [vmem:[%s4 + $0x28] sm:$0xff]
  %v149 = vld [vmem:[%s4 + $0x30] sm:$0xff]
  %v150 = vld [vmem:[%s4 + $0x38] sm:$0xff]
  %152 = vset.pattern.permute.xlu0 0
  %153 = vperm.xlu0 %152, %v143
  %v154 = vpop.permute.xlu0 %153
  %157 = vset.pattern.permute.xlu0 0
  %158 = vperm.xlu0 %157, %v144
  %v159 = vpop.permute.xlu0 %158
  %162 = vset.pattern.permute.xlu0 0
  %163 = vperm.xlu0 %162, %v145
  %v164 = vpop.permute.xlu0 %163
  %167 = vset.pattern.permute.xlu0 0
  %168 = vperm.xlu0 %167, %v146
  %v169 = vpop.permute.xlu0 %168
  %172 = vset.pattern.permute.xlu0 0
  %173 = vperm.xlu0 %172, %v147
  %v174 = vpop.permute.xlu0 %173
  %177 = vset.pattern.permute.xlu0 0
  %178 = vperm.xlu0 %177, %v148
  %v179 = vpop.permute.xlu0 %178
  %182 = vset.pattern.permute.xlu0 0
  %183 = vperm.xlu0 %182, %v149
  %v184 = vpop.permute.xlu0 %183
  %187 = vset.pattern.permute.xlu0 0
  %188 = vperm.xlu0 %187, %v150
  %v189 = vpop.permute.xlu0 %188
  %v199 = vunpack.c.l.b16 %v133
  %v200 = vunpack.c.l.b16 %v134
  %v201 = vunpack.c.l.b16 %v135
  %v202 = vunpack.c.l.b16 %v136
  %v203 = vunpack.c.l.b16 %v137
  %v204 = vunpack.c.l.b16 %v138
  %v205 = vunpack.c.l.b16 %v139
  %v206 = vunpack.c.l.b16 %v140
  %v207 = vpack.c.b16 %v200, %v199
  %v208 = vpack.c.b16 %v202, %v201
  %v209 = vpack.c.b16 %v204, %v203
  %v210 = vpack.c.b16 %v206, %v205
  %vm211 = vcmask 130048
  %v213 = vsel %vm211, %v207, 0
  %v216 = vsel %vm211, %v208, 0
  %v219 = vsel %vm211, %v209, 0
  %v222 = vsel %vm211, %v210, 0
  %224 = vmatprep.subr.bf16.mxu0 0
  %225 = vmatpush1.bf16.msra.mxu0 0
  %226 = vmatprep.subr.bf16.mxu0 0
  %227 = vmatpush1.bf16.msra.mxu0 0
  %228 = vmatprep.subr.bf16.mxu0 0
  %229 = vmatpush1.bf16.msra.mxu0 0
  %230 = vmatprep.subr.bf16.mxu0 0
  %231 = vmatpush1.bf16.msra.mxu0 0
  %232 = vmatprep.subr.bf16.mxu0 0
  %233 = vmatpush1.bf16.msra.mxu0 0
  %234 = vmatprep.subr.bf16.mxu0 0
  %235 = vmatpush1.bf16.msra.mxu0 0
  %236 = vmatprep.subr.bf16.mxu0 0
  %237 = vmatpush1.bf16.msra.mxu0 0
  %238 = vmatprep.subr.bf16.mxu0 %v142
  %239 = vmatpush1.bf16.msra.mxu0 %v141
  %240 = vmatprep.subr.bf16.mxu0 0
  %241 = vmatpush2.bf16.msra.mxu0 0
  %242 = vmatprep.subr.bf16.mxu0 0
  %243 = vmatpush2.bf16.msra.mxu0 0
  %244 = vmatprep.subr.bf16.mxu0 0
  %245 = vmatpush2.bf16.msra.mxu0 0
  %246 = vmatprep.subr.bf16.mxu0 0
  %247 = vmatpush2.bf16.msra.mxu0 0
  %248 = vmatprep.subr.bf16.mxu0 0
  %249 = vmatpush2.bf16.msra.mxu0 0
  %250 = vmatprep.subr.bf16.mxu0 0
  %251 = vmatpush2.bf16.msra.mxu0 0
  %252 = vmatprep.subr.bf16.mxu0 0
  %253 = vmatpush2.bf16.msra.mxu0 0
  %254 = vmatprep.subr.bf16.mxu0 0
  %255 = vmatpush2.bf16.msra.mxu0 0
  %256 = vmatprep.mubr.bf16.mxu0 0
  %257 = vmatmul.mubr.bf16.gmra.mxu0 %v213
  %v258 = vpop.f32.mrf.mxu0
  %v259 = vadd.f32 %v154, %v258
  %v260 = vpop.f32.mrf.mxu0
  %v261 = vadd.f32 %v154, %v260
  %v262 = vpop.f32.mrf.mxu0
  %v263 = vadd.f32 %v159, %v262
  %v264 = vpop.f32.mrf.mxu0
  %v265 = vadd.f32 %v159, %v264
  %266 = vmatprep.mubr.bf16.mxu0 0
  %267 = vmatmul.mubr.bf16.gmra.mxu0 %v216
  %v268 = vpop.f32.mrf.mxu0
  %v269 = vadd.f32 %v164, %v268
  %v270 = vpop.f32.mrf.mxu0
  %v271 = vadd.f32 %v164, %v270
  %v272 = vpop.f32.mrf.mxu0
  %v273 = vadd.f32 %v169, %v272
  %v274 = vpop.f32.mrf.mxu0
  %v275 = vadd.f32 %v169, %v274
  %276 = vmatprep.mubr.bf16.mxu0 0
  %277 = vmatmul.mubr.bf16.gmra.mxu0 %v219
  %v278 = vpop.f32.mrf.mxu0
  %v279 = vadd.f32 %v174, %v278
  %v280 = vpop.f32.mrf.mxu0
  %v281 = vadd.f32 %v174, %v280
  %v282 = vpop.f32.mrf.mxu0
  %v283 = vadd.f32 %v179, %v282
  %v284 = vpop.f32.mrf.mxu0
  %v285 = vadd.f32 %v179, %v284
  %286 = vmatprep.mubr.bf16.mxu0 0
  %287 = vmatmul.mubr.bf16.gmra.mxu0 %v222
  %v288 = vpop.f32.mrf.mxu0
  %v289 = vadd.f32 %v184, %v288
  %v290 = vpop.f32.mrf.mxu0
  %v291 = vadd.f32 %v184, %v290
  %v292 = vpop.f32.mrf.mxu0
  %v293 = vadd.f32 %v189, %v292
  %v294 = vpop.f32.mrf.mxu0
  %v295 = vadd.f32 %v189, %v294
  %296 = vdwg.mxu0
  %vm297 = vcmp.gt.f32.partialorder %v259, 0.0
  %vm298 = vcmp.gt.f32.partialorder %v261, 0.0
  %vm299 = vcmp.gt.f32.partialorder %v263, 0.0
  %vm300 = vcmp.gt.f32.partialorder %v265, 0.0
  %vm301 = vcmp.gt.f32.partialorder %v269, 0.0
  %vm302 = vcmp.gt.f32.partialorder %v271, 0.0
  %vm303 = vcmp.gt.f32.partialorder %v273, 0.0
  %vm304 = vcmp.gt.f32.partialorder %v275, 0.0
  %vm305 = vcmp.gt.f32.partialorder %v279, 0.0
  %vm306 = vcmp.gt.f32.partialorder %v281, 0.0
  %vm307 = vcmp.gt.f32.partialorder %v283, 0.0
  %vm308 = vcmp.gt.f32.partialorder %v285, 0.0
  %vm309 = vcmp.gt.f32.partialorder %v289, 0.0
  %vm310 = vcmp.gt.f32.partialorder %v291, 0.0
  %vm311 = vcmp.gt.f32.partialorder %v293, 0.0
  %vm312 = vcmp.gt.f32.partialorder %v295, 0.0
  %v313 = vmul.f32 %v259, 0.01
  %v314 = vmul.f32 %v261, 0.01
  %v315 = vmul.f32 %v263, 0.01
  %v316 = vmul.f32 %v265, 0.01
  %v317 = vmul.f32 %v269, 0.01
  %v318 = vmul.f32 %v271, 0.01
  %v319 = vmul.f32 %v273, 0.01
  %v320 = vmul.f32 %v275, 0.01
  %v321 = vmul.f32 %v279, 0.01
  %v322 = vmul.f32 %v281, 0.01
  %v323 = vmul.f32 %v283, 0.01
  %v324 = vmul.f32 %v285, 0.01
  %v325 = vmul.f32 %v289, 0.01
  %v326 = vmul.f32 %v291, 0.01
  %v327 = vmul.f32 %v293, 0.01
  %v328 = vmul.f32 %v295, 0.01
  %v329 = vsel %vm297, %v259, %v313
  %v330 = vsel %vm298, %v261, %v314
  %v331 = vsel %vm299, %v263, %v315
  %v332 = vsel %vm300, %v265, %v316
  %v333 = vsel %vm301, %v269, %v317
  %v334 = vsel %vm302, %v271, %v318
  %v335 = vsel %vm303, %v273, %v319
  %v336 = vsel %vm304, %v275, %v320
  %v337 = vsel %vm305, %v279, %v321
  %v338 = vsel %vm306, %v281, %v322
  %v339 = vsel %vm307, %v283, %v323
  %v340 = vsel %vm308, %v285, %v324
  %v341 = vsel %vm309, %v289, %v325
  %v342 = vsel %vm310, %v291, %v326
  %v343 = vsel %vm311, %v293, %v327
  %v344 = vsel %vm312, %v295, %v328
  %v345 = vld [vmem:[%s5] sm:$0xf]
  %v346 = vld [vmem:[%s5 + $0x4] sm:$0xf]
  %v347 = vld [vmem:[%s5 + $0x8] sm:$0xf]
  %v348 = vld [vmem:[%s5 + $0xc] sm:$0xf]
  %v349 = vld [vmem:[%s5 + $0x10] sm:$0xf]
  %v350 = vld [vmem:[%s5 + $0x14] sm:$0xf]
  %v351 = vld [vmem:[%s5 + $0x18] sm:$0xf]
  %v352 = vld [vmem:[%s5 + $0x1c] sm:$0xf]
  %v353 = vld [vmem:[%s5 + $0x20] sm:$0xf]
  %v354 = vld [vmem:[%s5 + $0x24] sm:$0xf]
  %v355 = vld [vmem:[%s5 + $0x28] sm:$0xf]
  %v356 = vld [vmem:[%s5 + $0x2c] sm:$0xf]
  %v357 = vld [vmem:[%s5 + $0x30] sm:$0xf]
  %v358 = vld [vmem:[%s5 + $0x34] sm:$0xf]
  %v359 = vld [vmem:[%s5 + $0x38] sm:$0xf]
  %v360 = vld [vmem:[%s5 + $0x3c] sm:$0xf]
  %v361 = vld [vmem:[%s5 + $0x40] sm:$0xf]
  %v362 = vld [vmem:[%s5 + $0x44] sm:$0xf]
  %v363 = vld [vmem:[%s5 + $0x48] sm:$0xf]
  %v364 = vld [vmem:[%s5 + $0x4c] sm:$0xf]
  %v365 = vld [vmem:[%s5 + $0x50] sm:$0xf]
  %v366 = vld [vmem:[%s5 + $0x54] sm:$0xf]
  %v367 = vld [vmem:[%s5 + $0x58] sm:$0xf]
  %v368 = vld [vmem:[%s5 + $0x5c] sm:$0xf]
  %v369 = vld [vmem:[%s5 + $0x60] sm:$0xf]
  %v370 = vld [vmem:[%s5 + $0x64] sm:$0xf]
  %v371 = vld [vmem:[%s5 + $0x68] sm:$0xf]
  %v372 = vld [vmem:[%s5 + $0x6c] sm:$0xf]
  %v373 = vld [vmem:[%s5 + $0x70] sm:$0xf]
  %v374 = vld [vmem:[%s5 + $0x74] sm:$0xf]
  %v375 = vld [vmem:[%s5 + $0x78] sm:$0xf]
  %v376 = vld [vmem:[%s5 + $0x7c] sm:$0xf]
  %v377 = vpack.c.bf16 %v331, %v329
  %v378 = vpack.c.bf16 %v332, %v330
  %v379 = vpack.c.bf16 %v335, %v333
  %v380 = vpack.c.bf16 %v336, %v334
  %v381 = vpack.c.bf16 %v339, %v337
  %v382 = vpack.c.bf16 %v340, %v338
  %v383 = vpack.c.bf16 %v343, %v341
  %v384 = vpack.c.bf16 %v344, %v342
  %v385 = vld [vmem:[%s6] sm:$0xff]
  %v386 = vld [vmem:[%s6 + $0x8] sm:$0xff]
  %v387 = vld [vmem:[%s6 + $0x10] sm:$0xff]
  %v388 = vld [vmem:[%s6 + $0x18] sm:$0xff]
  %v389 = vld [vmem:[%s6 + $0x20] sm:$0xff]
  %v390 = vld [vmem:[%s6 + $0x28] sm:$0xff]
  %v391 = vld [vmem:[%s6 + $0x30] sm:$0xff]
  %v392 = vld [vmem:[%s6 + $0x38] sm:$0xff]
  %v393 = vld [vmem:[%s6 + $0x40] sm:$0xff]
  %v394 = vld [vmem:[%s6 + $0x48] sm:$0xff]
  %v395 = vld [vmem:[%s6 + $0x50] sm:$0xff]
  %v396 = vld [vmem:[%s6 + $0x58] sm:$0xff]
  %v397 = vld [vmem:[%s6 + $0x60] sm:$0xff]
  %v398 = vld [vmem:[%s6 + $0x68] sm:$0xff]
  %v399 = vld [vmem:[%s6 + $0x70] sm:$0xff]
  %v400 = vld [vmem:[%s6 + $0x78] sm:$0xff]
  %v401 = vld [vmem:[%s6 + $0x80] sm:$0xff]
  %v402 = vld [vmem:[%s6 + $0x88] sm:$0xff]
  %v403 = vld [vmem:[%s6 + $0x90] sm:$0xff]
  %v404 = vld [vmem:[%s6 + $0x98] sm:$0xff]
  %v405 = vld [vmem:[%s6 + $0xa0] sm:$0xff]
  %v406 = vld [vmem:[%s6 + $0xa8] sm:$0xff]
  %v407 = vld [vmem:[%s6 + $0xb0] sm:$0xff]
  %v408 = vld [vmem:[%s6 + $0xb8] sm:$0xff]
  %v409 = vld [vmem:[%s6 + $0xc0] sm:$0xff]
  %v410 = vld [vmem:[%s6 + $0xc8] sm:$0xff]
  %v411 = vld [vmem:[%s6 + $0xd0] sm:$0xff]
  %v412 = vld [vmem:[%s6 + $0xd8] sm:$0xff]
  %v413 = vld [vmem:[%s6 + $0xe0] sm:$0xff]
  %v414 = vld [vmem:[%s6 + $0xe8] sm:$0xff]
  %v415 = vld [vmem:[%s6 + $0xf0] sm:$0xff]
  %v416 = vld [vmem:[%s6 + $0xf8] sm:$0xff]
  %418 = vset.pattern.permute.xlu0 0
  %419 = vperm.xlu0 %418, %v385
  %v420 = vpop.permute.xlu0 %419
  %423 = vset.pattern.permute.xlu0 0
  %424 = vperm.xlu0 %423, %v386
  %v425 = vpop.permute.xlu0 %424
  %428 = vset.pattern.permute.xlu0 0
  %429 = vperm.xlu0 %428, %v387
  %v430 = vpop.permute.xlu0 %429
  %433 = vset.pattern.permute.xlu0 0
  %434 = vperm.xlu0 %433, %v388
  %v435 = vpop.permute.xlu0 %434
  %438 = vset.pattern.permute.xlu0 0
  %439 = vperm.xlu0 %438, %v389
  %v440 = vpop.permute.xlu0 %439
  %443 = vset.pattern.permute.xlu0 0
  %444 = vperm.xlu0 %443, %v390
  %v445 = vpop.permute.xlu0 %444
  %448 = vset.pattern.permute.xlu0 0
  %449 = vperm.xlu0 %448, %v391
  %v450 = vpop.permute.xlu0 %449
  %453 = vset.pattern.permute.xlu0 0
  %454 = vperm.xlu0 %453, %v392
  %v455 = vpop.permute.xlu0 %454
  %458 = vset.pattern.permute.xlu0 0
  %459 = vperm.xlu0 %458, %v393
  %v460 = vpop.permute.xlu0 %459
  %463 = vset.pattern.permute.xlu0 0
  %464 = vperm.xlu0 %463, %v394
  %v465 = vpop.permute.xlu0 %464
  %468 = vset.pattern.permute.xlu0 0
  %469 = vperm.xlu0 %468, %v395
  %v470 = vpop.permute.xlu0 %469
  %473 = vset.pattern.permute.xlu0 0
  %474 = vperm.xlu0 %473, %v396
  %v475 = vpop.permute.xlu0 %474
  %478 = vset.pattern.permute.xlu0 0
  %479 = vperm.xlu0 %478, %v397
  %v480 = vpop.permute.xlu0 %479
  %483 = vset.pattern.permute.xlu0 0
  %484 = vperm.xlu0 %483, %v398
  %v485 = vpop.permute.xlu0 %484
  %488 = vset.pattern.permute.xlu0 0
  %489 = vperm.xlu0 %488, %v399
  %v490 = vpop.permute.xlu0 %489
  %493 = vset.pattern.permute.xlu0 0
  %494 = vperm.xlu0 %493, %v400
  %v495 = vpop.permute.xlu0 %494
  %498 = vset.pattern.permute.xlu0 0
  %499 = vperm.xlu0 %498, %v401
  %v500 = vpop.permute.xlu0 %499
  %503 = vset.pattern.permute.xlu0 0
  %504 = vperm.xlu0 %503, %v402
  %v505 = vpop.permute.xlu0 %504
  %508 = vset.pattern.permute.xlu0 0
  %509 = vperm.xlu0 %508, %v403
  %v510 = vpop.permute.xlu0 %509
  %513 = vset.pattern.permute.xlu0 0
  %514 = vperm.xlu0 %513, %v404
  %v515 = vpop.permute.xlu0 %514
  %518 = vset.pattern.permute.xlu0 0
  %519 = vperm.xlu0 %518, %v405
  %v520 = vpop.permute.xlu0 %519
  %523 = vset.pattern.permute.xlu0 0
  %524 = vperm.xlu0 %523, %v406
  %v525 = vpop.permute.xlu0 %524
  %528 = vset.pattern.permute.xlu0 0
  %529 = vperm.xlu0 %528, %v407
  %v530 = vpop.permute.xlu0 %529
  %533 = vset.pattern.permute.xlu0 0
  %534 = vperm.xlu0 %533, %v408
  %v535 = vpop.permute.xlu0 %534
  %538 = vset.pattern.permute.xlu0 0
  %539 = vperm.xlu0 %538, %v409
  %v540 = vpop.permute.xlu0 %539
  %543 = vset.pattern.permute.xlu0 0
  %544 = vperm.xlu0 %543, %v410
  %v545 = vpop.permute.xlu0 %544
  %548 = vset.pattern.permute.xlu0 0
  %549 = vperm.xlu0 %548, %v411
  %v550 = vpop.permute.xlu0 %549
  %553 = vset.pattern.permute.xlu0 0
  %554 = vperm.xlu0 %553, %v412
  %v555 = vpop.permute.xlu0 %554
  %558 = vset.pattern.permute.xlu0 0
  %559 = vperm.xlu0 %558, %v413
  %v560 = vpop.permute.xlu0 %559
  %563 = vset.pattern.permute.xlu0 0
  %564 = vperm.xlu0 %563, %v414
  %v565 = vpop.permute.xlu0 %564
  %568 = vset.pattern.permute.xlu0 0
  %569 = vperm.xlu0 %568, %v415
  %v570 = vpop.permute.xlu0 %569
  %573 = vset.pattern.permute.xlu0 0
  %574 = vperm.xlu0 %573, %v416
  %v575 = vpop.permute.xlu0 %574
  %v609 = vunpack.c.l.b16 %v345
  %v610 = vunpack.c.l.b16 %v346
  %v611 = vunpack.c.l.b16 %v347
  %v612 = vunpack.c.l.b16 %v348
  %v613 = vunpack.c.l.b16 %v349
  %v614 = vunpack.c.l.b16 %v350
  %v615 = vunpack.c.l.b16 %v351
  %v616 = vunpack.c.l.b16 %v352
  %v617 = vunpack.c.l.b16 %v353
  %v618 = vunpack.c.l.b16 %v354
  %v619 = vunpack.c.l.b16 %v355
  %v620 = vunpack.c.l.b16 %v356
  %v621 = vunpack.c.l.b16 %v357
  %v622 = vunpack.c.l.b16 %v358
  %v623 = vunpack.c.l.b16 %v359
  %v624 = vunpack.c.l.b16 %v360
  %v625 = vunpack.c.l.b16 %v361
  %v626 = vunpack.c.l.b16 %v362
  %v627 = vunpack.c.l.b16 %v363
  %v628 = vunpack.c.l.b16 %v364
  %v629 = vunpack.c.l.b16 %v365
  %v630 = vunpack.c.l.b16 %v366
  %v631 = vunpack.c.l.b16 %v367
  %v632 = vunpack.c.l.b16 %v368
  %v633 = vunpack.c.l.b16 %v369
  %v634 = vunpack.c.l.b16 %v370
  %v635 = vunpack.c.l.b16 %v371
  %v636 = vunpack.c.l.b16 %v372
  %v637 = vunpack.c.l.b16 %v373
  %v638 = vunpack.c.l.b16 %v374
  %v639 = vunpack.c.l.b16 %v375
  %v640 = vunpack.c.l.b16 %v376
  %v641 = vpack.c.b16 %v610, %v609
  %v642 = vpack.c.b16 %v612, %v611
  %v643 = vpack.c.b16 %v614, %v613
  %v644 = vpack.c.b16 %v616, %v615
  %v645 = vpack.c.b16 %v618, %v617
  %v646 = vpack.c.b16 %v620, %v619
  %v647 = vpack.c.b16 %v622, %v621
  %v648 = vpack.c.b16 %v624, %v623
  %v649 = vpack.c.b16 %v626, %v625
  %v650 = vpack.c.b16 %v628, %v627
  %v651 = vpack.c.b16 %v630, %v629
  %v652 = vpack.c.b16 %v632, %v631
  %v653 = vpack.c.b16 %v634, %v633
  %v654 = vpack.c.b16 %v636, %v635
  %v655 = vpack.c.b16 %v638, %v637
  %v656 = vpack.c.b16 %v640, %v639
  %vm657 = vcmask 523264
  %v659 = vsel %vm657, %v641, 0
  %v662 = vsel %vm657, %v642, 0
  %v665 = vsel %vm657, %v643, 0
  %v668 = vsel %vm657, %v644, 0
  %v671 = vsel %vm657, %v645, 0
  %v674 = vsel %vm657, %v646, 0
  %v677 = vsel %vm657, %v647, 0
  %v680 = vsel %vm657, %v648, 0
  %v683 = vsel %vm657, %v649, 0
  %v686 = vsel %vm657, %v650, 0
  %v689 = vsel %vm657, %v651, 0
  %v692 = vsel %vm657, %v652, 0
  %v695 = vsel %vm657, %v653, 0
  %v698 = vsel %vm657, %v654, 0
  %v701 = vsel %vm657, %v655, 0
  %v704 = vsel %vm657, %v656, 0
  %706 = vmatprep.subr.bf16.mxu0 0
  %707 = vmatpush1.bf16.msra.mxu0 0
  %708 = vmatprep.subr.bf16.mxu0 0
  %709 = vmatpush1.bf16.msra.mxu0 0
  %710 = vmatprep.subr.bf16.mxu0 0
  %711 = vmatpush1.bf16.msra.mxu0 0
  %712 = vmatprep.subr.bf16.mxu0 0
  %713 = vmatpush1.bf16.msra.mxu0 0
  %714 = vmatprep.subr.bf16.mxu0 %v384
  %715 = vmatpush1.bf16.msra.mxu0 %v383
  %716 = vmatprep.subr.bf16.mxu0 %v382
  %717 = vmatpush1.bf16.msra.mxu0 %v381
  %718 = vmatprep.subr.bf16.mxu0 %v380
  %719 = vmatpush1.bf16.msra.mxu0 %v379
  %720 = vmatprep.subr.bf16.mxu0 %v378
  %721 = vmatpush1.bf16.msra.mxu0 %v377
  %722 = vmatprep.subr.bf16.mxu0 0
  %723 = vmatpush2.bf16.msra.mxu0 0
  %724 = vmatprep.subr.bf16.mxu0 0
  %725 = vmatpush2.bf16.msra.mxu0 0
  %726 = vmatprep.subr.bf16.mxu0 0
  %727 = vmatpush2.bf16.msra.mxu0 0
  %728 = vmatprep.subr.bf16.mxu0 0
  %729 = vmatpush2.bf16.msra.mxu0 0
  %730 = vmatprep.subr.bf16.mxu0 0
  %731 = vmatpush2.bf16.msra.mxu0 0
  %732 = vmatprep.subr.bf16.mxu0 0
  %733 = vmatpush2.bf16.msra.mxu0 0
  %734 = vmatprep.subr.bf16.mxu0 0
  %735 = vmatpush2.bf16.msra.mxu0 0
  %736 = vmatprep.subr.bf16.mxu0 0
  %737 = vmatpush2.bf16.msra.mxu0 0
  %738 = vmatprep.mubr.bf16.mxu0 0
  %739 = vmatmul.mubr.bf16.gmra.mxu0 %v659
  %v740 = vpop.f32.mrf.mxu0
  %v741 = vadd.f32 %v420, %v740
  %v742 = vpop.f32.mrf.mxu0
  %v743 = vadd.f32 %v420, %v742
  %v744 = vpop.f32.mrf.mxu0
  %v745 = vadd.f32 %v425, %v744
  %v746 = vpop.f32.mrf.mxu0
  %v747 = vadd.f32 %v425, %v746
  %748 = vmatprep.mubr.bf16.mxu0 0
  %749 = vmatmul.mubr.bf16.gmra.mxu0 %v662
  %v750 = vpop.f32.mrf.mxu0
  %v751 = vadd.f32 %v430, %v750
  %v752 = vpop.f32.mrf.mxu0
  %v753 = vadd.f32 %v430, %v752
  %v754 = vpop.f32.mrf.mxu0
  %v755 = vadd.f32 %v435, %v754
  %v756 = vpop.f32.mrf.mxu0
  %v757 = vadd.f32 %v435, %v756
  %758 = vmatprep.mubr.bf16.mxu0 0
  %759 = vmatmul.mubr.bf16.gmra.mxu0 %v665
  %v760 = vpop.f32.mrf.mxu0
  %v761 = vadd.f32 %v440, %v760
  %v762 = vpop.f32.mrf.mxu0
  %v763 = vadd.f32 %v440, %v762
  %v764 = vpop.f32.mrf.mxu0
  %v765 = vadd.f32 %v445, %v764
  %v766 = vpop.f32.mrf.mxu0
  %v767 = vadd.f32 %v445, %v766
  %768 = vmatprep.mubr.bf16.mxu0 0
  %769 = vmatmul.mubr.bf16.gmra.mxu0 %v668
  %v770 = vpop.f32.mrf.mxu0
  %v771 = vadd.f32 %v450, %v770
  %v772 = vpop.f32.mrf.mxu0
  %v773 = vadd.f32 %v450, %v772
  %v774 = vpop.f32.mrf.mxu0
  %v775 = vadd.f32 %v455, %v774
  %v776 = vpop.f32.mrf.mxu0
  %v777 = vadd.f32 %v455, %v776
  %778 = vmatprep.mubr.bf16.mxu0 0
  %779 = vmatmul.mubr.bf16.gmra.mxu0 %v671
  %v780 = vpop.f32.mrf.mxu0
  %v781 = vadd.f32 %v460, %v780
  %v782 = vpop.f32.mrf.mxu0
  %v783 = vadd.f32 %v460, %v782
  %v784 = vpop.f32.mrf.mxu0
  %v785 = vadd.f32 %v465, %v784
  %v786 = vpop.f32.mrf.mxu0
  %v787 = vadd.f32 %v465, %v786
  %788 = vmatprep.mubr.bf16.mxu0 0
  %789 = vmatmul.mubr.bf16.gmra.mxu0 %v674
  %v790 = vpop.f32.mrf.mxu0
  %v791 = vadd.f32 %v470, %v790
  %v792 = vpop.f32.mrf.mxu0
  %v793 = vadd.f32 %v470, %v792
  %v794 = vpop.f32.mrf.mxu0
  %v795 = vadd.f32 %v475, %v794
  %v796 = vpop.f32.mrf.mxu0
  %v797 = vadd.f32 %v475, %v796
  %798 = vmatprep.mubr.bf16.mxu0 0
  %799 = vmatmul.mubr.bf16.gmra.mxu0 %v677
  %v800 = vpop.f32.mrf.mxu0
  %v801 = vadd.f32 %v480, %v800
  %v802 = vpop.f32.mrf.mxu0
  %v803 = vadd.f32 %v480, %v802
  %v804 = vpop.f32.mrf.mxu0
  %v805 = vadd.f32 %v485, %v804
  %v806 = vpop.f32.mrf.mxu0
  %v807 = vadd.f32 %v485, %v806
  %808 = vmatprep.mubr.bf16.mxu0 0
  %809 = vmatmul.mubr.bf16.gmra.mxu0 %v680
  %v810 = vpop.f32.mrf.mxu0
  %v811 = vadd.f32 %v490, %v810
  %v812 = vpop.f32.mrf.mxu0
  %v813 = vadd.f32 %v490, %v812
  %v814 = vpop.f32.mrf.mxu0
  %v815 = vadd.f32 %v495, %v814
  %v816 = vpop.f32.mrf.mxu0
  %v817 = vadd.f32 %v495, %v816
  %818 = vmatprep.mubr.bf16.mxu0 0
  %819 = vmatmul.mubr.bf16.gmra.mxu0 %v683
  %v820 = vpop.f32.mrf.mxu0
  %v821 = vadd.f32 %v500, %v820
  %v822 = vpop.f32.mrf.mxu0
  %v823 = vadd.f32 %v500, %v822
  %v824 = vpop.f32.mrf.mxu0
  %v825 = vadd.f32 %v505, %v824
  %v826 = vpop.f32.mrf.mxu0
  %v827 = vadd.f32 %v505, %v826
  %828 = vmatprep.mubr.bf16.mxu0 0
  %829 = vmatmul.mubr.bf16.gmra.mxu0 %v686
  %v830 = vpop.f32.mrf.mxu0
  %v831 = vadd.f32 %v510, %v830
  %v832 = vpop.f32.mrf.mxu0
  %v833 = vadd.f32 %v510, %v832
  %v834 = vpop.f32.mrf.mxu0
  %v835 = vadd.f32 %v515, %v834
  %v836 = vpop.f32.mrf.mxu0
  %v837 = vadd.f32 %v515, %v836
  %838 = vmatprep.mubr.bf16.mxu0 0
  %839 = vmatmul.mubr.bf16.gmra.mxu0 %v689
  %v840 = vpop.f32.mrf.mxu0
  %v841 = vadd.f32 %v520, %v840
  %v842 = vpop.f32.mrf.mxu0
  %v843 = vadd.f32 %v520, %v842
  %v844 = vpop.f32.mrf.mxu0
  %v845 = vadd.f32 %v525, %v844
  %v846 = vpop.f32.mrf.mxu0
  %v847 = vadd.f32 %v525, %v846
  %848 = vmatprep.mubr.bf16.mxu0 0
  %849 = vmatmul.mubr.bf16.gmra.mxu0 %v692
  %v850 = vpop.f32.mrf.mxu0
  %v851 = vadd.f32 %v530, %v850
  %v852 = vpop.f32.mrf.mxu0
  %v853 = vadd.f32 %v530, %v852
  %v854 = vpop.f32.mrf.mxu0
  %v855 = vadd.f32 %v535, %v854
  %v856 = vpop.f32.mrf.mxu0
  %v857 = vadd.f32 %v535, %v856
  %858 = vmatprep.mubr.bf16.mxu0 0
  %859 = vmatmul.mubr.bf16.gmra.mxu0 %v695
  %v860 = vpop.f32.mrf.mxu0
  %v861 = vadd.f32 %v540, %v860
  %v862 = vpop.f32.mrf.mxu0
  %v863 = vadd.f32 %v540, %v862
  %v864 = vpop.f32.mrf.mxu0
  %v865 = vadd.f32 %v545, %v864
  %v866 = vpop.f32.mrf.mxu0
  %v867 = vadd.f32 %v545, %v866
  %868 = vmatprep.mubr.bf16.mxu0 0
  %869 = vmatmul.mubr.bf16.gmra.mxu0 %v698
  %v870 = vpop.f32.mrf.mxu0
  %v871 = vadd.f32 %v550, %v870
  %v872 = vpop.f32.mrf.mxu0
  %v873 = vadd.f32 %v550, %v872
  %v874 = vpop.f32.mrf.mxu0
  %v875 = vadd.f32 %v555, %v874
  %v876 = vpop.f32.mrf.mxu0
  %v877 = vadd.f32 %v555, %v876
  %878 = vmatprep.mubr.bf16.mxu0 0
  %879 = vmatmul.mubr.bf16.gmra.mxu0 %v701
  %v880 = vpop.f32.mrf.mxu0
  %v881 = vadd.f32 %v560, %v880
  %v882 = vpop.f32.mrf.mxu0
  %v883 = vadd.f32 %v560, %v882
  %v884 = vpop.f32.mrf.mxu0
  %v885 = vadd.f32 %v565, %v884
  %v886 = vpop.f32.mrf.mxu0
  %v887 = vadd.f32 %v565, %v886
  %888 = vmatprep.mubr.bf16.mxu0 0
  %889 = vmatmul.mubr.bf16.gmra.mxu0 %v704
  %v890 = vpop.f32.mrf.mxu0
  %v891 = vadd.f32 %v570, %v890
  %v892 = vpop.f32.mrf.mxu0
  %v893 = vadd.f32 %v570, %v892
  %v894 = vpop.f32.mrf.mxu0
  %v895 = vadd.f32 %v575, %v894
  %v896 = vpop.f32.mrf.mxu0
  %v897 = vadd.f32 %v575, %v896
  %898 = vdwg.mxu0
  %vm899 = vcmp.gt.f32.partialorder %v741, 0.0
  %vm900 = vcmp.gt.f32.partialorder %v743, 0.0
  %vm901 = vcmp.gt.f32.partialorder %v745, 0.0
  %vm902 = vcmp.gt.f32.partialorder %v747, 0.0
  %vm903 = vcmp.gt.f32.partialorder %v751, 0.0
  %vm904 = vcmp.gt.f32.partialorder %v753, 0.0
  %vm905 = vcmp.gt.f32.partialorder %v755, 0.0
  %vm906 = vcmp.gt.f32.partialorder %v757, 0.0
  %vm907 = vcmp.gt.f32.partialorder %v761, 0.0
  %vm908 = vcmp.gt.f32.partialorder %v763, 0.0
  %vm909 = vcmp.gt.f32.partialorder %v765, 0.0
  %vm910 = vcmp.gt.f32.partialorder %v767, 0.0
  %vm911 = vcmp.gt.f32.partialorder %v771, 0.0
  %vm912 = vcmp.gt.f32.partialorder %v773, 0.0
  %vm913 = vcmp.gt.f32.partialorder %v775, 0.0
  %vm914 = vcmp.gt.f32.partialorder %v777, 0.0
  %vm915 = vcmp.gt.f32.partialorder %v781, 0.0
  %vm916 = vcmp.gt.f32.partialorder %v783, 0.0
  %vm917 = vcmp.gt.f32.partialorder %v785, 0.0
  %vm918 = vcmp.gt.f32.partialorder %v787, 0.0
  %vm919 = vcmp.gt.f32.partialorder %v791, 0.0
  %vm920 = vcmp.gt.f32.partialorder %v793, 0.0
  %vm921 = vcmp.gt.f32.partialorder %v795, 0.0
  %vm922 = vcmp.gt.f32.partialorder %v797, 0.0
  %vm923 = vcmp.gt.f32.partialorder %v801, 0.0
  %vm924 = vcmp.gt.f32.partialorder %v803, 0.0
  %vm925 = vcmp.gt.f32.partialorder %v805, 0.0
  %vm926 = vcmp.gt.f32.partialorder %v807, 0.0
  %vm927 = vcmp.gt.f32.partialorder %v811, 0.0
  %vm928 = vcmp.gt.f32.partialorder %v813, 0.0
  %vm929 = vcmp.gt.f32.partialorder %v815, 0.0
  %vm930 = vcmp.gt.f32.partialorder %v817, 0.0
  %vm931 = vcmp.gt.f32.partialorder %v821, 0.0
  %vm932 = vcmp.gt.f32.partialorder %v823, 0.0
  %vm933 = vcmp.gt.f32.partialorder %v825, 0.0
  %vm934 = vcmp.gt.f32.partialorder %v827, 0.0
  %vm935 = vcmp.gt.f32.partialorder %v831, 0.0
  %vm936 = vcmp.gt.f32.partialorder %v833, 0.0
  %vm937 = vcmp.gt.f32.partialorder %v835, 0.0
  %vm938 = vcmp.gt.f32.partialorder %v837, 0.0
  %vm939 = vcmp.gt.f32.partialorder %v841, 0.0
  %vm940 = vcmp.gt.f32.partialorder %v843, 0.0
  %vm941 = vcmp.gt.f32.partialorder %v845, 0.0
  %vm942 = vcmp.gt.f32.partialorder %v847, 0.0
  %vm943 = vcmp.gt.f32.partialorder %v851, 0.0
  %vm944 = vcmp.gt.f32.partialorder %v853, 0.0
  %vm945 = vcmp.gt.f32.partialorder %v855, 0.0
  %vm946 = vcmp.gt.f32.partialorder %v857, 0.0
  %vm947 = vcmp.gt.f32.partialorder %v861, 0.0
  %vm948 = vcmp.gt.f32.partialorder %v863, 0.0
  %vm949 = vcmp.gt.f32.partialorder %v865, 0.0
  %vm950 = vcmp.gt.f32.partialorder %v867, 0.0
  %vm951 = vcmp.gt.f32.partialorder %v871, 0.0
  %vm952 = vcmp.gt.f32.partialorder %v873, 0.0
  %vm953 = vcmp.gt.f32.partialorder %v875, 0.0
  %vm954 = vcmp.gt.f32.partialorder %v877, 0.0
  %vm955 = vcmp.gt.f32.partialorder %v881, 0.0
  %vm956 = vcmp.gt.f32.partialorder %v883, 0.0
  %vm957 = vcmp.gt.f32.partialorder %v885, 0.0
  %vm958 = vcmp.gt.f32.partialorder %v887, 0.0
  %vm959 = vcmp.gt.f32.partialorder %v891, 0.0
  %vm960 = vcmp.gt.f32.partialorder %v893, 0.0
  %vm961 = vcmp.gt.f32.partialorder %v895, 0.0
  %vm962 = vcmp.gt.f32.partialorder %v897, 0.0
  %v963 = vmul.f32 %v741, 0.01
  %v964 = vmul.f32 %v743, 0.01
  %v965 = vmul.f32 %v745, 0.01
  %v966 = vmul.f32 %v747, 0.01
  %v967 = vmul.f32 %v751, 0.01
  %v968 = vmul.f32 %v753, 0.01
  %v969 = vmul.f32 %v755, 0.01
  %v970 = vmul.f32 %v757, 0.01
  %v971 = vmul.f32 %v761, 0.01
  %v972 = vmul.f32 %v763, 0.01
  %v973 = vmul.f32 %v765, 0.01
  %v974 = vmul.f32 %v767, 0.01
  %v975 = vmul.f32 %v771, 0.01
  %v976 = vmul.f32 %v773, 0.01
  %v977 = vmul.f32 %v775, 0.01
  %v978 = vmul.f32 %v777, 0.01
  %v979 = vmul.f32 %v781, 0.01
  %v980 = vmul.f32 %v783, 0.01
  %v981 = vmul.f32 %v785, 0.01
  %v982 = vmul.f32 %v787, 0.01
  %v983 = vmul.f32 %v791, 0.01
  %v984 = vmul.f32 %v793, 0.01
  %v985 = vmul.f32 %v795, 0.01
  %v986 = vmul.f32 %v797, 0.01
  %v987 = vmul.f32 %v801, 0.01
  %v988 = vmul.f32 %v803, 0.01
  %v989 = vmul.f32 %v805, 0.01
  %v990 = vmul.f32 %v807, 0.01
  %v991 = vmul.f32 %v811, 0.01
  %v992 = vmul.f32 %v813, 0.01
  %v993 = vmul.f32 %v815, 0.01
  %v994 = vmul.f32 %v817, 0.01
  %v995 = vmul.f32 %v821, 0.01
  %v996 = vmul.f32 %v823, 0.01
  %v997 = vmul.f32 %v825, 0.01
  %v998 = vmul.f32 %v827, 0.01
  %v999 = vmul.f32 %v831, 0.01
  %v1000 = vmul.f32 %v833, 0.01
  %v1001 = vmul.f32 %v835, 0.01
  %v1002 = vmul.f32 %v837, 0.01
  %v1003 = vmul.f32 %v841, 0.01
  %v1004 = vmul.f32 %v843, 0.01
  %v1005 = vmul.f32 %v845, 0.01
  %v1006 = vmul.f32 %v847, 0.01
  %v1007 = vmul.f32 %v851, 0.01
  %v1008 = vmul.f32 %v853, 0.01
  %v1009 = vmul.f32 %v855, 0.01
  %v1010 = vmul.f32 %v857, 0.01
  %v1011 = vmul.f32 %v861, 0.01
  %v1012 = vmul.f32 %v863, 0.01
  %v1013 = vmul.f32 %v865, 0.01
  %v1014 = vmul.f32 %v867, 0.01
  %v1015 = vmul.f32 %v871, 0.01
  %v1016 = vmul.f32 %v873, 0.01
  %v1017 = vmul.f32 %v875, 0.01
  %v1018 = vmul.f32 %v877, 0.01
  %v1019 = vmul.f32 %v881, 0.01
  %v1020 = vmul.f32 %v883, 0.01
  %v1021 = vmul.f32 %v885, 0.01
  %v1022 = vmul.f32 %v887, 0.01
  %v1023 = vmul.f32 %v891, 0.01
  %v1024 = vmul.f32 %v893, 0.01
  %v1025 = vmul.f32 %v895, 0.01
  %v1026 = vmul.f32 %v897, 0.01
  %v1027 = vsel %vm899, %v741, %v963
  %v1028 = vsel %vm900, %v743, %v964
  %v1029 = vsel %vm901, %v745, %v965
  %v1030 = vsel %vm902, %v747, %v966
  %v1031 = vsel %vm903, %v751, %v967
  %v1032 = vsel %vm904, %v753, %v968
  %v1033 = vsel %vm905, %v755, %v969
  %v1034 = vsel %vm906, %v757, %v970
  %v1035 = vsel %vm907, %v761, %v971
  %v1036 = vsel %vm908, %v763, %v972
  %v1037 = vsel %vm909, %v765, %v973
  %v1038 = vsel %vm910, %v767, %v974
  %v1039 = vsel %vm911, %v771, %v975
  %v1040 = vsel %vm912, %v773, %v976
  %v1041 = vsel %vm913, %v775, %v977
  %v1042 = vsel %vm914, %v777, %v978
  %v1043 = vsel %vm915, %v781, %v979
  %v1044 = vsel %vm916, %v783, %v980
  %v1045 = vsel %vm917, %v785, %v981
  %v1046 = vsel %vm918, %v787, %v982
  %v1047 = vsel %vm919, %v791, %v983
  %v1048 = vsel %vm920, %v793, %v984
  %v1049 = vsel %vm921, %v795, %v985
  %v1050 = vsel %vm922, %v797, %v986
  %v1051 = vsel %vm923, %v801, %v987
  %v1052 = vsel %vm924, %v803, %v988
  %v1053 = vsel %vm925, %v805, %v989
  %v1054 = vsel %vm926, %v807, %v990
  %v1055 = vsel %vm927, %v811, %v991
  %v1056 = vsel %vm928, %v813, %v992
  %v1057 = vsel %vm929, %v815, %v993
  %v1058 = vsel %vm930, %v817, %v994
  %v1059 = vsel %vm931, %v821, %v995
  %v1060 = vsel %vm932, %v823, %v996
  %v1061 = vsel %vm933, %v825, %v997
  %v1062 = vsel %vm934, %v827, %v998
  %v1063 = vsel %vm935, %v831, %v999
  %v1064 = vsel %vm936, %v833, %v1000
  %v1065 = vsel %vm937, %v835, %v1001
  %v1066 = vsel %vm938, %v837, %v1002
  %v1067 = vsel %vm939, %v841, %v1003
  %v1068 = vsel %vm940, %v843, %v1004
  %v1069 = vsel %vm941, %v845, %v1005
  %v1070 = vsel %vm942, %v847, %v1006
  %v1071 = vsel %vm943, %v851, %v1007
  %v1072 = vsel %vm944, %v853, %v1008
  %v1073 = vsel %vm945, %v855, %v1009
  %v1074 = vsel %vm946, %v857, %v1010
  %v1075 = vsel %vm947, %v861, %v1011
  %v1076 = vsel %vm948, %v863, %v1012
  %v1077 = vsel %vm949, %v865, %v1013
  %v1078 = vsel %vm950, %v867, %v1014
  %v1079 = vsel %vm951, %v871, %v1015
  %v1080 = vsel %vm952, %v873, %v1016
  %v1081 = vsel %vm953, %v875, %v1017
  %v1082 = vsel %vm954, %v877, %v1018
  %v1083 = vsel %vm955, %v881, %v1019
  %v1084 = vsel %vm956, %v883, %v1020
  %v1085 = vsel %vm957, %v885, %v1021
  %v1086 = vsel %vm958, %v887, %v1022
  %v1087 = vsel %vm959, %v891, %v1023
  %v1088 = vsel %vm960, %v893, %v1024
  %v1089 = vsel %vm961, %v895, %v1025
  %v1090 = vsel %vm962, %v897, %v1026
  %v1091 = vld [vmem:[%s7] sm:$0xff]
  %v1092 = vld [vmem:[%s7 + $0x8] sm:$0xff]
  %v1093 = vpack.c.bf16 %v1029, %v1027
  %v1094 = vpack.c.bf16 %v1030, %v1028
  %v1095 = vpack.c.bf16 %v1033, %v1031
  %v1096 = vpack.c.bf16 %v1034, %v1032
  %v1097 = vpack.c.bf16 %v1037, %v1035
  %v1098 = vpack.c.bf16 %v1038, %v1036
  %v1099 = vpack.c.bf16 %v1041, %v1039
  %v1100 = vpack.c.bf16 %v1042, %v1040
  %v1101 = vpack.c.bf16 %v1045, %v1043
  %v1102 = vpack.c.bf16 %v1046, %v1044
  %v1103 = vpack.c.bf16 %v1049, %v1047
  %v1104 = vpack.c.bf16 %v1050, %v1048
  %v1105 = vpack.c.bf16 %v1053, %v1051
  %v1106 = vpack.c.bf16 %v1054, %v1052
  %v1107 = vpack.c.bf16 %v1057, %v1055
  %v1108 = vpack.c.bf16 %v1058, %v1056
  %v1109 = vpack.c.bf16 %v1061, %v1059
  %v1110 = vpack.c.bf16 %v1062, %v1060
  %v1111 = vpack.c.bf16 %v1065, %v1063
  %v1112 = vpack.c.bf16 %v1066, %v1064
  %v1113 = vpack.c.bf16 %v1069, %v1067
  %v1114 = vpack.c.bf16 %v1070, %v1068
  %v1115 = vpack.c.bf16 %v1073, %v1071
  %v1116 = vpack.c.bf16 %v1074, %v1072
  %v1117 = vpack.c.bf16 %v1077, %v1075
  %v1118 = vpack.c.bf16 %v1078, %v1076
  %v1119 = vpack.c.bf16 %v1081, %v1079
  %v1120 = vpack.c.bf16 %v1082, %v1080
  %v1121 = vpack.c.bf16 %v1085, %v1083
  %v1122 = vpack.c.bf16 %v1086, %v1084
  %v1123 = vpack.c.bf16 %v1089, %v1087
  %v1124 = vpack.c.bf16 %v1090, %v1088
  %v1125 = vld [vmem:[%s8] sm:$0xff]
  %v1126 = vld [vmem:[%s8 + $0x8] sm:$0xff]
  %1128 = vset.pattern.permute.xlu0 0
  %1129 = vperm.xlu0 %1128, %v1125
  %v1130 = vpop.permute.xlu0 %1129
  %1133 = vset.pattern.permute.xlu0 0
  %1134 = vperm.xlu0 %1133, %v1126
  %v1135 = vpop.permute.xlu0 %1134
  %v1139 = vunpack.c.l.b16 %v1091
  %v1140 = vunpack.c.h.b16 %v1091
  %v1141 = vunpack.c.l.b16 %v1092
  %v1142 = vunpack.c.h.b16 %v1092
  %v1143 = vpack.c.b16 %v1141, %v1139
  %v1144 = vpack.c.b16 %v1142, %v1140
  %1147 = vmatprep.subr.bf16.mxu0 %v1108
  %1148 = vmatpush1.bf16.msra.mxu0 %v1107
  %1149 = vmatprep.subr.bf16.mxu0 %v1106
  %1150 = vmatpush1.bf16.msra.mxu0 %v1105
  %1151 = vmatprep.subr.bf16.mxu0 %v1104
  %1152 = vmatpush1.bf16.msra.mxu0 %v1103
  %1153 = vmatprep.subr.bf16.mxu0 %v1102
  %1154 = vmatpush1.bf16.msra.mxu0 %v1101
  %1155 = vmatprep.subr.bf16.mxu0 %v1100
  %1156 = vmatpush1.bf16.msra.mxu0 %v1099
  %1157 = vmatprep.subr.bf16.mxu0 %v1098
  %1158 = vmatpush1.bf16.msra.mxu0 %v1097
  %1159 = vmatprep.subr.bf16.mxu0 %v1096
  %1160 = vmatpush1.bf16.msra.mxu0 %v1095
  %1161 = vmatprep.subr.bf16.mxu0 %v1094
  %1162 = vmatpush1.bf16.msra.mxu0 %v1093
  %1163 = vmatprep.subr.bf16.mxu0 %v1124
  %1164 = vmatpush2.bf16.msra.mxu0 %v1123
  %1165 = vmatprep.subr.bf16.mxu0 %v1122
  %1166 = vmatpush2.bf16.msra.mxu0 %v1121
  %1167 = vmatprep.subr.bf16.mxu0 %v1120
  %1168 = vmatpush2.bf16.msra.mxu0 %v1119
  %1169 = vmatprep.subr.bf16.mxu0 %v1118
  %1170 = vmatpush2.bf16.msra.mxu0 %v1117
  %1171 = vmatprep.subr.bf16.mxu0 %v1116
  %1172 = vmatpush2.bf16.msra.mxu0 %v1115
  %1173 = vmatprep.subr.bf16.mxu0 %v1114
  %1174 = vmatpush2.bf16.msra.mxu0 %v1113
  %1175 = vmatprep.subr.bf16.mxu0 %v1112
  %1176 = vmatpush2.bf16.msra.mxu0 %v1111
  %1177 = vmatprep.subr.bf16.mxu0 %v1110
  %1178 = vmatpush2.bf16.msra.mxu0 %v1109
  %1179 = vmatprep.mubr.bf16.mxu0 %v1144
  %1180 = vmatmul.mubr.bf16.gmra.mxu0 %v1143
  %v1181 = vpop.f32.mrf.mxu0
  %v1182 = vadd.f32 %v1130, %v1181
  %v1183 = vpop.f32.mrf.mxu0
  %v1184 = vadd.f32 %v1130, %v1183
  %v1185 = vpop.f32.mrf.mxu0
  %v1186 = vadd.f32 %v1135, %v1185
  %v1187 = vpop.f32.mrf.mxu0
  %v1188 = vadd.f32 %v1135, %v1187
  %1189 = vdwg.mxu0
  %vm1190 = vcmp.gt.f32.partialorder %v1182, 0.0
  %vm1191 = vcmp.gt.f32.partialorder %v1184, 0.0
  %vm1192 = vcmp.gt.f32.partialorder %v1186, 0.0
  %vm1193 = vcmp.gt.f32.partialorder %v1188, 0.0
  %v1194 = vmul.f32 %v1182, 0.01
  %v1195 = vmul.f32 %v1184, 0.01
  %v1196 = vmul.f32 %v1186, 0.01
  %v1197 = vmul.f32 %v1188, 0.01
  %v1198 = vsel %vm1190, %v1182, %v1194
  %v1199 = vsel %vm1191, %v1184, %v1195
  %v1200 = vsel %vm1192, %v1186, %v1196
  %v1201 = vsel %vm1193, %v1188, %v1197
  %v1202 = vld [vmem:[%s9] sm:$0xf]
  %v1203 = vld [vmem:[%s9 + $0x4] sm:$0x1]
  %v1204 = vpack.c.bf16 %v1200, %v1198
  %v1205 = vpack.c.bf16 %v1201, %v1199
  %v1206 = vld [vmem:[%s10] sm:$0xff]
  %v1207 = vld [vmem:[%s10 + $0x8] sm:$0x1]
  %1209 = vset.pattern.permute.xlu0 0
  %1210 = vperm.xlu0 %1209, %v1206
  %v1211 = vpop.permute.xlu0 %1210
  %1214 = vset.pattern.permute.xlu0 0
  %1215 = vperm.xlu0 %1214, %v1207
  %v1216 = vpop.permute.xlu0 %1215
  %v1220 = vunpack.c.l.b16 %v1202
  %v1221 = vunpack.c.l.b16 %v1203
  %v1222 = vpack.c.b16 %v1221, %v1220
  %v1224 = vsel %vm211, %v1222, 0
  %1226 = vmatprep.subr.bf16.mxu0 0
  %1227 = vmatpush1.bf16.msra.mxu0 0
  %1228 = vmatprep.subr.bf16.mxu0 0
  %1229 = vmatpush1.bf16.msra.mxu0 0
  %1230 = vmatprep.subr.bf16.mxu0 0
  %1231 = vmatpush1.bf16.msra.mxu0 0
  %1232 = vmatprep.subr.bf16.mxu0 0
  %1233 = vmatpush1.bf16.msra.mxu0 0
  %1234 = vmatprep.subr.bf16.mxu0 0
  %1235 = vmatpush1.bf16.msra.mxu0 0
  %1236 = vmatprep.subr.bf16.mxu0 0
  %1237 = vmatpush1.bf16.msra.mxu0 0
  %1238 = vmatprep.subr.bf16.mxu0 0
  %1239 = vmatpush1.bf16.msra.mxu0 0
  %1240 = vmatprep.subr.bf16.mxu0 %v1205
  %1241 = vmatpush1.bf16.msra.mxu0 %v1204
  %1242 = vmatprep.subr.bf16.mxu0 0
  %1243 = vmatpush2.bf16.msra.mxu0 0
  %1244 = vmatprep.subr.bf16.mxu0 0
  %1245 = vmatpush2.bf16.msra.mxu0 0
  %1246 = vmatprep.subr.bf16.mxu0 0
  %1247 = vmatpush2.bf16.msra.mxu0 0
  %1248 = vmatprep.subr.bf16.mxu0 0
  %1249 = vmatpush2.bf16.msra.mxu0 0
  %1250 = vmatprep.subr.bf16.mxu0 0
  %1251 = vmatpush2.bf16.msra.mxu0 0
  %1252 = vmatprep.subr.bf16.mxu0 0
  %1253 = vmatpush2.bf16.msra.mxu0 0
  %1254 = vmatprep.subr.bf16.mxu0 0
  %1255 = vmatpush2.bf16.msra.mxu0 0
  %1256 = vmatprep.subr.bf16.mxu0 0
  %1257 = vmatpush2.bf16.msra.mxu0 0
  %1258 = vmatprep.mubr.bf16.mxu0 0
  %1259 = vmatmul.mubr.bf16.gmra.mxu0 %v1224
  %v1260 = vpop.f32.mrf.mxu0
  %v1261 = vadd.f32 %v1211, %v1260
  %v1262 = vpop.f32.mrf.mxu0
  %v1263 = vadd.f32 %v1211, %v1262
  %v1264 = vpop.f32.mrf.mxu0
  %v1265 = vadd.f32 %v1216, %v1264
  %v1266 = vpop.f32.mrf.mxu0
  %v1267 = vadd.f32 %v1216, %v1266
  %1268 = vdwg.mxu0
  %1269 = vst [vmem:[%s11] sm:$0xff] %v1261
  %1270 = vst [vmem:[%s11 + $0x8] sm:$0xff] %v1263
  %1271 = vst [vmem:[%s11 + $0x10] sm:$0x1] %v1265
  %1272 = vst [vmem:[%s11 + $0x18] sm:$0x1] %v1267
  // Predicated region
  $region46: #{mlp_forward.1} parent=0 // pred_check
    _
  $region47: #{mlp_forward.1} parent=0 // pred_check_branch
    %1274 = sbr.rel (0) target = $region49
  $region48: #{mlp_forward.1} parent=0 // pred_region
    _
  $region49: #{mlp_forward.1} parent=0 // pred_fallthru
    _
  // Predicated region
  $region50: #{mlp_forward.1} parent=0 // pred_check
    _
  $region51: #{mlp_forward.1} parent=0 // pred_check_branch
    %1276 = sbr.rel (0) target = $region53
  $region52: #{mlp_forward.1} parent=0 // pred_region
    _
  $region53: #{mlp_forward.1} parent=0 // pred_fallthru
    _

</llo_original>
